<compile_context>
chip_gen: v7x
topology: tpu7x:2x2x1
jax: 0.10.0
libtpu: 0.0.40
codegen_flags: <defaults>
</compile_context>

<pallas_src>
import jax
import jax.numpy as jnp
from jax import lax
from jax.experimental import pallas as pl
from jax.experimental.pallas import tpu as pltpu

BN_EPS = 1e-5
_LANE = 128
_TN_MAX = 256                      # N-tile: 2x128 MXU tiles on v5e, 1x256 on v6e/v7x
_VMEM_LIMIT = 32 * 1024 * 1024     # safe on v5e (16 MiB scoped default) .. v7x (64 MiB physical)


def _round_up(a, b):
    return (a + b - 1) // b * b


def _matmul_stats_kernel(x_ref, w_ref, z_ref, sum_ref, sumsq_ref):
    """grid = (feature tiles, N tiles).  N is the last ('arbitrary') axis, so the
    per-feature stat outputs stay VMEM-resident and accumulate across N tiles."""
    @pl.when(pl.program_id(1) == 0)
    def _():
        sum_ref[...] = jnp.zeros_like(sum_ref)
        sumsq_ref[...] = jnp.zeros_like(sumsq_ref)

    z = jnp.dot(x_ref[...], w_ref[...], preferred_element_type=jnp.float32)
    z_ref[...] = z
    sum_ref[...] += jnp.sum(z, axis=0, keepdims=True)
    sumsq_ref[...] += jnp.sum(z * z, axis=0, keepdims=True)


def _bn_relu_kernel(z_ref, scale_ref, shift_ref, o_ref):
    o_ref[...] = jnp.maximum(
        z_ref[...] * scale_ref[...] + shift_ref[...], 0.0
    ).astype(o_ref.dtype)


@jax.jit
def fc_bn_act(x, w_t, b, gamma, beta):
    """x: (N, in_ch); w_t: (in_ch, out_ch) (pre-transposed nn.Linear weight);
    b, gamma, beta: (1, out_ch).  Returns relu(batchnorm_train(linear(x))) as (N, out_ch) f32."""
    del b  # exactly cancelled by training-mode BN's batch-mean subtraction
    n, in_ch = x.shape
    out_ch = w_t.shape[1]

    # Lane-dense feature padding; N tiled in multiples of 16 (bf16 sublane packing).
    tf = _LANE if out_ch <= _LANE else 2 * _LANE
    f_pad = _round_up(out_ch, tf)
    tn = min(_TN_MAX, _round_up(n, 16))
    n_pad = _round_up(n, tn)
    nf, nn = f_pad // tf, n_pad // tn

    # bf16 MXU operands (halves matmul input DMA); zero padding keeps batch stats exact.
    x_p = jnp.zeros((n_pad, in_ch), jnp.bfloat16).at[:n, :].set(x.astype(jnp.bfloat16))
    w_p = jnp.zeros((in_ch, f_pad), jnp.bfloat16).at[:, :out_ch].set(w_t.astype(jnp.bfloat16))
    gamma_p = jnp.zeros((1, f_pad), jnp.float32).at[:, :out_ch].set(gamma.astype(jnp.float32))
    beta_p = jnp.zeros((1, f_pad), jnp.float32).at[:, :out_ch].set(beta.astype(jnp.float32))

    # Pass 1: tiled matmul + per-feature sum / sum-of-squares accumulation.
    z, s, ss = pl.pallas_call(
        _matmul_stats_kernel,
        grid=(nf, nn),
        in_specs=[
            pl.BlockSpec((tn, in_ch), lambda j, i: (i, 0)),   # x: new tile per N step
            pl.BlockSpec((in_ch, tf), lambda j, i: (0, j)),   # W: resident across N axis
        ],
        out_specs=[
            pl.BlockSpec((tn, tf), lambda j, i: (i, j)),      # z tile (lane-dense)
            pl.BlockSpec((1, tf), lambda j, i: (0, j)),       # sum   (accumulator)
            pl.BlockSpec((1, tf), lambda j, i: (0, j)),       # sumsq (accumulator)
        ],
        out_shape=[
            jax.ShapeDtypeStruct((n_pad, f_pad), jnp.float32),
            jax.ShapeDtypeStruct((1, f_pad), jnp.float32),
            jax.ShapeDtypeStruct((1, f_pad), jnp.float32),
        ],
        compiler_params=pltpu.CompilerParams(
            dimension_semantics=("parallel", "arbitrary"),
            vmem_limit_bytes=_VMEM_LIMIT,
        ),
    )(x_p, w_p)

    # Tiny (1, f_pad) per-feature math in plain JAX: fold stats + affine into scale/shift.
    inv_n = jnp.float32(1.0 / n)                       # divide by the TRUE batch size
    mean = s * inv_n
    var = jnp.maximum(ss * inv_n - mean * mean, 0.0)   # biased variance (PyTorch training BN)
    scale = gamma_p * lax.rsqrt(var + BN_EPS)          # gamma folded into rsqrt
    shift = beta_p - mean * scale                      # mean + beta folded into shift

    # Pass 2: out = relu(z * scale + shift), elementwise, fully parallel tiles.
    out = pl.pallas_call(
        _bn_relu_kernel,
        grid=(nn, nf),
        in_specs=[
            pl.BlockSpec((tn, tf), lambda i, j: (i, j)),
            pl.BlockSpec((1, tf), lambda i, j: (0, j)),
            pl.BlockSpec((1, tf), lambda i, j: (0, j)),
        ],
        out_specs=pl.BlockSpec((tn, tf), lambda i, j: (i, j)),
        out_shape=jax.ShapeDtypeStruct((n_pad, f_pad), jnp.float32),
        compiler_params=pltpu.CompilerParams(
            dimension_semantics=("parallel", "parallel"),
            vmem_limit_bytes=_VMEM_LIMIT,
        ),
    )(z, scale, shift)

    return out[:n, :out_ch]


def fc_bn_act_ref(x, w_t, b, gamma, beta):
    # Mirrors the kernel's mixed precision: bf16 matmul operands, f32 accumulate/epilogue.
    z = jnp.dot(x.astype(jnp.bfloat16), w_t.astype(jnp.bfloat16),
                preferred_element_type=jnp.float32) + b
    mean = jnp.mean(z, axis=0, keepdims=True)
    var = jnp.mean((z - mean) ** 2, axis=0, keepdims=True)
    y = (z - mean) / jnp.sqrt(var + BN_EPS) * gamma + beta
    return jnp.maximum(y, 0.0)


if __name__ == "__main__":
    batch, in_ch, out_ch = 8, 32, 64

    key = jax.random.PRNGKey(0)
    kx, kw, kb, kg, kbeta = jax.random.split(key, 5)

    x = jax.random.normal(kx, (batch, in_ch), dtype=jnp.float32)
    # nn.Linear(in_ch, out_ch): weight (out_ch, in_ch) -> store transposed (in_ch, out_ch)
    w_t = jax.random.normal(kw, (in_ch, out_ch), dtype=jnp.float32) * (1.0 / jnp.sqrt(in_ch))
    b = jax.random.normal(kb, (1, out_ch), dtype=jnp.float32) * 0.1
    gamma = 1.0 + 0.1 * jax.random.normal(kg, (1, out_ch), dtype=jnp.float32)
    beta = 0.1 * jax.random.normal(kbeta, (1, out_ch), dtype=jnp.float32)

    out = fc_bn_act(x, w_t, b, gamma, beta)
    out = jax.block_until_ready(out)

    ref = fc_bn_act_ref(x, w_t, b, gamma, beta)
    assert out.shape == (batch, out_ch)
    assert jnp.allclose(out, ref, atol=2e-3, rtol=2e-3), "mismatch vs JAX reference"

    print("KERNEL_OK")
</pallas_src>

<mosaic_0001>
module attributes {stable_mosaic.version = 11 : i64} {
  func.func @_bn_relu_kernel(%arg0: i32, %arg1: i32, %arg2: memref<16x128xf32, #tpu.memory_space<vmem>>, %arg3: memref<1x128xf32, #tpu.memory_space<vmem>>, %arg4: memref<1x128xf32, #tpu.memory_space<vmem>>, %arg5: memref<16x128xf32, #tpu.memory_space<vmem>>) attributes {dimension_semantics = [#tpu.dimension_semantics<parallel>, #tpu.dimension_semantics<parallel>], iteration_bounds = array<i64: 1, 1>, scalar_prefetch = 0 : i64, scratch_operands = 0 : i64, tpu.core_type = #tpu.core_type<tc>, window_params = [{transform_indices = @transform_0, window_bounds = array<i64: 16, 128>}, {transform_indices = @transform_1, window_bounds = array<i64: 1, 128>}, {transform_indices = @transform_2, window_bounds = array<i64: 1, 128>}, {transform_indices = @transform_3, window_bounds = array<i64: 16, 128>}]} {
    %c0 = arith.constant 0 : index
    %c0_0 = arith.constant 0 : index
    %0 = vector.load %arg2[%c0, %c0_0] : memref<16x128xf32, #tpu.memory_space<vmem>>, vector<16x128xf32>
    %c0_1 = arith.constant 0 : index
    %c0_2 = arith.constant 0 : index
    %1 = vector.load %arg3[%c0_1, %c0_2] : memref<1x128xf32, #tpu.memory_space<vmem>>, vector<1x128xf32>
    %2 = vector.broadcast %1 : vector<1x128xf32> to vector<16x128xf32>
    %3 = arith.mulf %0, %2 : vector<16x128xf32>
    %c0_3 = arith.constant 0 : index
    %c0_4 = arith.constant 0 : index
    %4 = vector.load %arg4[%c0_3, %c0_4] : memref<1x128xf32, #tpu.memory_space<vmem>>, vector<1x128xf32>
    %5 = vector.broadcast %4 : vector<1x128xf32> to vector<16x128xf32>
    %6 = arith.addf %3, %5 : vector<16x128xf32>
    %cst = arith.constant 0.000000e+00 : f32
    %7 = vector.broadcast %cst : f32 to vector<16x128xf32>
    %8 = arith.maximumf %6, %7 : vector<16x128xf32>
    %c0_5 = arith.constant 0 : index
    %c0_6 = arith.constant 0 : index
    %9 = vector.load %arg5[%c0_5, %c0_6] : memref<16x128xf32, #tpu.memory_space<vmem>>, vector<16x128xf32>
    tpu.vector_store %arg5[%c0_5, %c0_6], %8 {strides = array<i32>} : memref<16x128xf32, #tpu.memory_space<vmem>>, vector<16x128xf32>,
    return
  }
  func.func @transform_0(%arg0: i32, %arg1: i32) -> (i32, i32) {
    %c0_i32 = arith.constant 0 : i32
    return %arg0, %arg1 : i32, i32
  }
  func.func @transform_1(%arg0: i32, %arg1: i32) -> (i32, i32) {
    %c0_i32 = arith.constant 0 : i32
    %c0_i32_0 = arith.constant 0 : i32
    return %c0_i32, %arg1 : i32, i32
  }
  func.func @transform_2(%arg0: i32, %arg1: i32) -> (i32, i32) {
    %c0_i32 = arith.constant 0 : i32
    %c0_i32_0 = arith.constant 0 : i32
    return %c0_i32, %arg1 : i32, i32
  }
  func.func @transform_3(%arg0: i32, %arg1: i32) -> (i32, i32) {
    %c0_i32 = arith.constant 0 : i32
    return %arg0, %arg1 : i32, i32
  }
}

module attributes {stable_mosaic.version = 11 : i64} {
  func.func @_matmul_stats_kernel(%arg0: i32, %arg1: i32, %arg2: memref<16x32xbf16, #tpu.memory_space<vmem>>, %arg3: memref<32x128xbf16, #tpu.memory_space<vmem>>, %arg4: memref<16x128xf32, #tpu.memory_space<vmem>>, %arg5: memref<1x128xf32, #tpu.memory_space<vmem>>, %arg6: memref<1x128xf32, #tpu.memory_space<vmem>>) attributes {dimension_semantics = [#tpu.dimension_semantics<parallel>, #tpu.dimension_semantics<arbitrary>], iteration_bounds = array<i64: 1, 1>, scalar_prefetch = 0 : i64, scratch_operands = 0 : i64, tpu.core_type = #tpu.core_type<tc>, window_params = [{transform_indices = @transform_0, window_bounds = array<i64: 16, 32>}, {transform_indices = @transform_1, window_bounds = array<i64: 32, 128>}, {transform_indices = @transform_2, window_bounds = array<i64: 16, 128>}, {transform_indices = @transform_3, window_bounds = array<i64: 1, 128>}, {transform_indices = @transform_4, window_bounds = array<i64: 1, 128>}]} {
    %c0_i32 = arith.constant 0 : i32
    %0 = arith.cmpi eq, %arg1, %c0_i32 : i32
    %1 = arith.extui %0 : i1 to i32
    %c0_i32_0 = arith.constant 0 : i32
    %2 = arith.cmpi ne, %1, %c0_i32_0 : i32
    scf.if %2 {
      %cst_16 = arith.constant 0.000000e+00 : f32
      %18 = vector.broadcast %cst_16 : f32 to vector<1x128xf32>
      %c0_17 = arith.constant 0 : index
      %c0_18 = arith.constant 0 : index
      %19 = vector.load %arg5[%c0_17, %c0_18] : memref<1x128xf32, #tpu.memory_space<vmem>>, vector<1x128xf32>
      tpu.vector_store %arg5[%c0_17, %c0_18], %18 {strides = array<i32>} : memref<1x128xf32, #tpu.memory_space<vmem>>, vector<1x128xf32>,
      %cst_19 = arith.constant 0.000000e+00 : f32
      %20 = vector.broadcast %cst_19 : f32 to vector<1x128xf32>
      %c0_20 = arith.constant 0 : index
      %c0_21 = arith.constant 0 : index
      %21 = vector.load %arg6[%c0_20, %c0_21] : memref<1x128xf32, #tpu.memory_space<vmem>>, vector<1x128xf32>
      tpu.vector_store %arg6[%c0_20, %c0_21], %20 {strides = array<i32>} : memref<1x128xf32, #tpu.memory_space<vmem>>, vector<1x128xf32>,
    } else {
    }
    %c0 = arith.constant 0 : index
    %c0_1 = arith.constant 0 : index
    %3 = vector.load %arg2[%c0, %c0_1] : memref<16x32xbf16, #tpu.memory_space<vmem>>, vector<16x32xbf16>
    %c0_2 = arith.constant 0 : index
    %c0_3 = arith.constant 0 : index
    %4 = vector.load %arg3[%c0_2, %c0_3] : memref<32x128xbf16, #tpu.memory_space<vmem>>, vector<32x128xbf16>
    %cst = arith.constant dense<0.000000e+00> : vector<16x128xf32>
    %5 = tpu.matmul %3, %4, %cst {dimension_numbers = #tpu.dot_dimension_numbers<[1], [0], [0], [1], [0, 0, 1, 1], [], []>} : vector<16x32xbf16>, vector<32x128xbf16>, vector<16x128xf32> -> vector<16x128xf32>
    %c0_4 = arith.constant 0 : index
    %c0_5 = arith.constant 0 : index
    %6 = vector.load %arg4[%c0_4, %c0_5] : memref<16x128xf32, #tpu.memory_space<vmem>>, vector<16x128xf32>
    tpu.vector_store %arg4[%c0_4, %c0_5], %5 {strides = array<i32>} : memref<16x128xf32, #tpu.memory_space<vmem>>, vector<16x128xf32>,
    %c0_6 = arith.constant 0 : index
    %c0_7 = arith.constant 0 : index
    %7 = vector.load %arg5[%c0_6, %c0_7] : memref<1x128xf32, #tpu.memory_space<vmem>>, vector<1x128xf32>
    %cst_8 = arith.constant dense<0.000000e+00> : vector<128xf32>
    %8 = vector.multi_reduction <add>, %5, %cst_8 [0] : vector<16x128xf32> to vector<128xf32>
    %9 = vector.shape_cast %8 : vector<128xf32> to vector<1x128xf32>
    %10 = arith.addf %7, %9 : vector<1x128xf32>
    %c0_9 = arith.constant 0 : index
    %c0_10 = arith.constant 0 : index
    %11 = vector.load %arg5[%c0_9, %c0_10] : memref<1x128xf32, #tpu.memory_space<vmem>>, vector<1x128xf32>
    tpu.vector_store %arg5[%c0_9, %c0_10], %10 {strides = array<i32>} : memref<1x128xf32, #tpu.memory_space<vmem>>, vector<1x128xf32>,
    %c0_11 = arith.constant 0 : index
    %c0_12 = arith.constant 0 : index
    %12 = vector.load %arg6[%c0_11, %c0_12] : memref<1x128xf32, #tpu.memory_space<vmem>>, vector<1x128xf32>
    %13 = arith.mulf %5, %5 : vector<16x128xf32>
    %cst_13 = arith.constant dense<0.000000e+00> : vector<128xf32>
    %14 = vector.multi_reduction <add>, %13, %cst_13 [0] : vector<16x128xf32> to vector<128xf32>
    %15 = vector.shape_cast %14 : vector<128xf32> to vector<1x128xf32>
    %16 = arith.addf %12, %15 : vector<1x128xf32>
    %c0_14 = arith.constant 0 : index
    %c0_15 = arith.constant 0 : index
    %17 = vector.load %arg6[%c0_14, %c0_15] : memref<1x128xf32, #tpu.memory_space<vmem>>, vector<1x128xf32>
    tpu.vector_store %arg6[%c0_14, %c0_15], %16 {strides = array<i32>} : memref<1x128xf32, #tpu.memory_space<vmem>>, vector<1x128xf32>,
    return
  }
  func.func @transform_0(%arg0: i32, %arg1: i32) -> (i32, i32) {
    %c0_i32 = arith.constant 0 : i32
    %c0_i32_0 = arith.constant 0 : i32
    return %arg1, %c0_i32 : i32, i32
  }
  func.func @transform_1(%arg0: i32, %arg1: i32) -> (i32, i32) {
    %c0_i32 = arith.constant 0 : i32
    %c0_i32_0 = arith.constant 0 : i32
    return %c0_i32, %arg0 : i32, i32
  }
  func.func @transform_2(%arg0: i32, %arg1: i32) -> (i32, i32) {
    %c0_i32 = arith.constant 0 : i32
    return %arg1, %arg0 : i32, i32
  }
  func.func @transform_3(%arg0: i32, %arg1: i32) -> (i32, i32) {
    %c0_i32 = arith.constant 0 : i32
    %c0_i32_0 = arith.constant 0 : i32
    return %c0_i32, %arg0 : i32, i32
  }
  func.func @transform_4(%arg0: i32, %arg1: i32) -> (i32, i32) {
    %c0_i32 = arith.constant 0 : i32
    %c0_i32_0 = arith.constant 0 : i32
    return %c0_i32, %arg0 : i32, i32
  }
}

</mosaic_0001>

<llo_original>
// kernel: fc_bn_act.3
$region0: #{fc_bn_act.3}
  #allocation0 [shape = 'u32[]', space=smem, size = 0x4, offset = 0x4, fixed_abs, tag = 'smem constant byte address 0x4 - core index']
  #allocation1 [shape = 'u32[144,128]{1,0:T(1,128)}', space=vmem, size = 0x12000, scoped, tag = 'internal scratch']
  %s0 = inlined_call_operand.vmem [shape: f32[16,128], index: 0, kind: input, shape index: {}]
  %s1 = inlined_call_operand.vmem [shape: f32[1,128], index: 1, kind: input, shape index: {}]
  %s2 = inlined_call_operand.vmem [shape: f32[1,128], index: 2, kind: input, shape index: {}]
  %s3 = inlined_call_operand.vmem [shape: f32[16,128], index: 3, kind: output, shape index: {}]
  %s4 = sld [smem:[#allocation0]]
  $region22: #{fc_bn_act.3} parent=0
    _
  %s6 = ssub.s32 1, %s4
  %s7 = scalar_select 0, %s6, %s4
  // Predicated region
  $region2: #{fc_bn_act.3} parent=0 // pred_check
    _
  $region3: #{fc_bn_act.3} parent=0 // pred_check_branch
    %9 = sbr.rel (0) target = $region5
  $region4: #{fc_bn_act.3} parent=0 // pred_region
    _
  $region5: #{fc_bn_act.3} parent=0 // pred_fallthru
    _
  // Predicated region
  $region6: #{fc_bn_act.3} parent=0 // pred_check
    _
  $region7: #{fc_bn_act.3} parent=0 // pred_check_branch
    %11 = sbr.rel (0) target = $region9
  $region8: #{fc_bn_act.3} parent=0 // pred_region
    _
  $region9: #{fc_bn_act.3} parent=0 // pred_fallthru
    _
  // Predicated region
  $region10: #{fc_bn_act.3} parent=0 // pred_check
    _
  $region11: #{fc_bn_act.3} parent=0 // pred_check_branch
    %13 = sbr.rel (0) target = $region13
  $region12: #{fc_bn_act.3} parent=0 // pred_region
    _
  $region13: #{fc_bn_act.3} parent=0 // pred_fallthru
    _
  %v14 = vld [vmem:[%s0] sm:$0xff]
  %v15 = vld [vmem:[%s0 + $0x8] sm:$0xff]
  %v16 = vld [vmem:[%s1] sm:$0x1]
  %v18 = vlaneseq
  %v19 = vshrl.u32 %v18, 7
  %v20 = vsub.s32 0, %v19
  %v21 = vrot.slane %v16, %v20
  %v23 = vmul.f32 %v14, %v21
  %v24 = vmul.f32 %v15, %v21
  %v25 = vld [vmem:[%s2] sm:$0x1]
  %v27 = vlaneseq
  %v28 = vshrl.u32 %v27, 7
  %v29 = vsub.s32 0, %v28
  %v30 = vrot.slane %v25, %v29
  %v32 = vadd.f32 %v23, %v30
  %v33 = vadd.f32 %v24, %v30
  %v34 = vmax.f32 %v32, 0.0
  %v35 = vmax.f32 %v33, 0.0
  %36 = vst [vmem:[%s3] sm:$0xff] %v34
  %37 = vst [vmem:[%s3 + $0x8] sm:$0xff] %v35
  // Predicated region
  $region14: #{fc_bn_act.3} parent=0 // pred_check
    _
  $region15: #{fc_bn_act.3} parent=0 // pred_check_branch
    %39 = sbr.rel (0) target = $region17
  $region16: #{fc_bn_act.3} parent=0 // pred_region
    _
  $region17: #{fc_bn_act.3} parent=0 // pred_fallthru
    _
  // Predicated region
  $region18: #{fc_bn_act.3} parent=0 // pred_check
    _
  $region19: #{fc_bn_act.3} parent=0 // pred_check_branch
    %41 = sbr.rel (0) target = $region21
  $region20: #{fc_bn_act.3} parent=0 // pred_region
    _
  $region21: #{fc_bn_act.3} parent=0 // pred_fallthru
    _

// kernel: fc_bn_act.2
$region0: #{fc_bn_act.2}
  #allocation0 [shape = 'u32[]', space=smem, size = 0x4, offset = 0x4, fixed_abs, tag = 'smem constant byte address 0x4 - core index']
  #allocation1 [shape = 'u32[144,128]{1,0:T(1,128)}', space=vmem, size = 0x12000, scoped, tag = 'internal scratch']
  %s0 = inlined_call_operand.vmem [shape: bf16[16,32], index: 0, kind: input, shape index: {}]
  %s1 = inlined_call_operand.vmem [shape: bf16[32,128], index: 1, kind: input, shape index: {}]
  %s2 = inlined_call_operand.vmem [shape: f32[16,128], index: 2, kind: output, shape index: {0}]
  %s3 = inlined_call_operand.vmem [shape: f32[1,128], index: 3, kind: output, shape index: {1}]
  %s4 = inlined_call_operand.vmem [shape: f32[1,128], index: 4, kind: output, shape index: {2}]
  %5 = xla_tuple %s2, %s3, %s4
  %s6 = sld [smem:[#allocation0]]
  $region38: #{fc_bn_act.2} parent=0
    _
  %s8 = ssub.s32 1, %s6
  %s9 = scalar_select 0, %s8, %s6
  // Predicated region
  $region2: #{fc_bn_act.2} parent=0 // pred_check
    _
  $region3: #{fc_bn_act.2} parent=0 // pred_check_branch
    %11 = sbr.rel (0) target = $region5
  $region4: #{fc_bn_act.2} parent=0 // pred_region
    _
  $region5: #{fc_bn_act.2} parent=0 // pred_fallthru
    _
  // Predicated region
  $region6: #{fc_bn_act.2} parent=0 // pred_check
    _
  $region7: #{fc_bn_act.2} parent=0 // pred_check_branch
    %13 = sbr.rel (0) target = $region9
  $region8: #{fc_bn_act.2} parent=0 // pred_region
    _
  $region9: #{fc_bn_act.2} parent=0 // pred_fallthru
    _
  %p15 = scmp.eq.s32.totalorder 0, 0
  // Predicated region
  $region10: #{fc_bn_act.2} parent=0 // pred_check
    %p16 = pneg %p15
  $region11: #{fc_bn_act.2} parent=0 // pred_check_branch
    %18 = sbr.rel (%p16) target = $region13
  $region12: #{fc_bn_act.2} parent=0 // pred_region
    %19 = vst [vmem:[%s3] sm:$0x1] 0.0
    %20 = vst [vmem:[%s4] sm:$0x1] 0.0
  $region13: #{fc_bn_act.2} parent=0 // pred_fallthru
    _
  %v21 = vld [vmem:[%s0] sm:$0xf]
  %v22 = vld [vmem:[%s0 + $0x4] sm:$0xf]
  %v23 = vld [vmem:[%s1] sm:$0xf]
  %v24 = vld [vmem:[%s1 + $0x4] sm:$0xf]
  %v25 = vld [vmem:[%s1 + $0x8] sm:$0xf]
  %v26 = vld [vmem:[%s1 + $0xc] sm:$0xf]
  %v29 = vunpack.c.l.b16 %v21
  %v30 = vunpack.c.l.b16 %v22
  %v31 = vpack.c.b16 %v30, %v29
  %v36 = vunpack.c.l.b16 %v23
  %v37 = vunpack.c.l.b16 %v24
  %v38 = vunpack.c.l.b16 %v25
  %v39 = vunpack.c.l.b16 %v26
  %v40 = vpack.c.b16 %v37, %v36
  %v41 = vpack.c.b16 %v39, %v38
  %vm44 = vcmask 261120
  %v46 = vsel %vm44, %v31, 0
  %48 = vmatprep.subr.bf16.mxu0 0
  %49 = vmatpush1.bf16.msra.mxu0 %v40
  %50 = vmatprep.subr.bf16.mxu0 0
  %51 = vmatpush1.bf16.msra.mxu0 %v41
  %52 = vmatprep.subr.bf16.mxu0 0
  %53 = vmatpush1.bf16.msra.mxu0 0
  %54 = vmatprep.subr.bf16.mxu0 0
  %55 = vmatpush1.bf16.msra.mxu0 0
  %56 = vmatprep.subr.bf16.mxu0 0
  %57 = vmatpush1.bf16.msra.mxu0 0
  %58 = vmatprep.subr.bf16.mxu0 0
  %59 = vmatpush1.bf16.msra.mxu0 0
  %60 = vmatprep.subr.bf16.mxu0 0
  %61 = vmatpush1.bf16.msra.mxu0 0
  %62 = vmatprep.subr.bf16.mxu0 0
  %63 = vmatpush1.bf16.msra.mxu0 0
  %64 = vmatprep.subr.bf16.mxu0 0
  %65 = vmatpush1.bf16.msra.mxu0 0
  %66 = vmatprep.subr.bf16.mxu0 0
  %67 = vmatpush1.bf16.msra.mxu0 0
  %68 = vmatprep.subr.bf16.mxu0 0
  %69 = vmatpush1.bf16.msra.mxu0 0
  %70 = vmatprep.subr.bf16.mxu0 0
  %71 = vmatpush1.bf16.msra.mxu0 0
  %72 = vmatprep.subr.bf16.mxu0 0
  %73 = vmatpush1.bf16.msra.mxu0 0
  %74 = vmatprep.subr.bf16.mxu0 0
  %75 = vmatpush1.bf16.msra.mxu0 0
  %76 = vmatprep.subr.bf16.mxu0 0
  %77 = vmatpush1.bf16.msra.mxu0 0
  %78 = vmatprep.subr.bf16.mxu0 0
  %79 = vmatpush1.bf16.msra.mxu0 0
  %80 = vmatprep.mubr.bf16.mxu0 0
  %81 = vmatmul.mubr.bf16.gmra.mrb[0].mxu0 %v46
  %v82 = vpop.f32.mrb[0].mxu0
  %v83 = vadd.f32 0.0, %v82
  %v84 = vpop.f32.mrb[0].mxu0
  %v85 = vpop.f32.mrb[0].mxu0
  %v86 = vadd.f32 0.0, %v85
  %v87 = vpop.f32.mrb[0].mxu0
  %88 = vdwg.mxu0
  %89 = vst [vmem:[%s2] sm:$0xff] %v83
  %90 = vst [vmem:[%s2 + $0x8] sm:$0xff] %v86
  %v91 = vld [vmem:[%s3] sm:$0x1]
  %v92 = vadd.f32 %v83, %v86
  %v93 = vrot.slane %v92, 4
  %v94 = vadd.f32 %v92, %v93
  %v95 = vrot.slane %v94, 2
  %v96 = vadd.f32 %v94, %v95
  %v97 = vrot.slane %v96, 1
  %v98 = vadd.f32 %v96, %v97
  %v99 = vadd.f32 %v91, %v98
  %100 = vst [vmem:[%s3] sm:$0x1] %v99
  %v101 = vld [vmem:[%s4] sm:$0x1]
  %v102 = vmul.f32 %v83, %v83
  %v103 = vmul.f32 %v86, %v86
  %v104 = vadd.f32 %v102, %v103
  %v105 = vrot.slane %v104, 4
  %v106 = vadd.f32 %v104, %v105
  %v107 = vrot.slane %v106, 2
  %v108 = vadd.f32 %v106, %v107
  %v109 = vrot.slane %v108, 1
  %v110 = vadd.f32 %v108, %v109
  %v111 = vadd.f32 %v101, %v110
  %112 = vst [vmem:[%s4] sm:$0x1] %v111
  // Predicated region
  $region14: #{fc_bn_act.2} parent=0 // pred_check
    _
  $region15: #{fc_bn_act.2} parent=0 // pred_check_branch
    %114 = sbr.rel (0) target = $region17
  $region16: #{fc_bn_act.2} parent=0 // pred_region
    _
  $region17: #{fc_bn_act.2} parent=0 // pred_fallthru
    _
  // Predicated region
  $region18: #{fc_bn_act.2} parent=0 // pred_check
    _
  $region19: #{fc_bn_act.2} parent=0 // pred_check_branch
    %116 = sbr.rel (0) target = $region21
  $region20: #{fc_bn_act.2} parent=0 // pred_region
    _
  $region21: #{fc_bn_act.2} parent=0 // pred_fallthru
    _
  // Predicated region
  $region22: #{fc_bn_act.2} parent=0 // pred_check
    _
  $region23: #{fc_bn_act.2} parent=0 // pred_check_branch
    %118 = sbr.rel (0) target = $region25
  $region24: #{fc_bn_act.2} parent=0 // pred_region
    _
  $region25: #{fc_bn_act.2} parent=0 // pred_fallthru
    _
  // Predicated region
  $region26: #{fc_bn_act.2} parent=0 // pred_check
    _
  $region27: #{fc_bn_act.2} parent=0 // pred_check_branch
    %120 = sbr.rel (0) target = $region29
  $region28: #{fc_bn_act.2} parent=0 // pred_region
    _
  $region29: #{fc_bn_act.2} parent=0 // pred_fallthru
    _
  // Predicated region
  $region30: #{fc_bn_act.2} parent=0 // pred_check
    _
  $region31: #{fc_bn_act.2} parent=0 // pred_check_branch
    %122 = sbr.rel (0) target = $region33
  $region32: #{fc_bn_act.2} parent=0 // pred_region
    _
  $region33: #{fc_bn_act.2} parent=0 // pred_fallthru
    _
  // Predicated region
  $region34: #{fc_bn_act.2} parent=0 // pred_check
    _
  $region35: #{fc_bn_act.2} parent=0 // pred_check_branch
    %124 = sbr.rel (0) target = $region37
  $region36: #{fc_bn_act.2} parent=0 // pred_region
    _
  $region37: #{fc_bn_act.2} parent=0 // pred_fallthru
    _

</llo_original>
